<compile_context>
chip_gen: v5e
topology: v5e:2x2
jax: 0.10.0
libtpu: 0.0.40
codegen_flags: <defaults>
</compile_context>

<pallas_src>
import functools
import math

import jax
import jax.numpy as jnp
from jax.experimental import pallas as pl
from jax.experimental.pallas import tpu as pltpu


_ACTIVATIONS = {
    "ReLU": lambda v: jnp.maximum(v, 0.0),
    "GELU": jax.nn.gelu,
    "Tanh": jnp.tanh,
    "Sigmoid": jax.nn.sigmoid,
}


def resolve_layer_sizes(input_dim, dims, output_dim=None):
    """Mirror MLP.__init__: per-layer (fan_in, fan_out); falsy dim -> previous // 2."""
    dims = list(dims)
    dims.insert(0, input_dim)
    for i in range(1, len(dims)):
        if not dims[i]:
            dims[i] = dims[i - 1] // 2
    sizes = list(zip(dims[:-1], dims[1:]))          # dense_layer_i
    if output_dim is not None:
        sizes.append((dims[-1], output_dim))        # last_linear
    return sizes


def init_mlp_params(key, layer_sizes):
    """PyTorch nn.Linear default init: W, b ~ U(-1/sqrt(fan_in), 1/sqrt(fan_in)).
    Weights kept in PyTorch (out, in) layout; prepare_mlp_params transposes them once."""
    ws, bs = [], []
    for fan_in, fan_out in layer_sizes:
        key, kw, kb = jax.random.split(key, 3)
        lim = 1.0 / math.sqrt(fan_in)
        ws.append(jax.random.uniform(kw, (fan_out, fan_in), jnp.float32, -lim, lim))
        bs.append(jax.random.uniform(kb, (fan_out,), jnp.float32, -lim, lim))
    return ws, bs


def prepare_mlp_params(ws, bs, *, lane_multiple=128, dtype=jnp.float32):
    """ONE-TIME layout prep — run once, outside the per-call hot path.

    - transpose PyTorch (out, in) weights to (in, out) so the kernel does x @ W
    - zero-pad every *hidden* width up to a multiple of `lane_multiple` (lane-dense MXU
      operands / activations); exact: relu(0+0)=0 and matching zero rows of the next
      weight contribute nothing.  The final output width is left unpadded.
    - reshape biases to 2-D (1, N) rows (sublane-broadcast-friendly adds in the kernel)
    """
    n = len(ws)
    pad_to = lambda d: -(-d // lane_multiple) * lane_multiple
    out_w = [w.shape[0] for w in ws]
    in_w = [w.shape[1] for w in ws]
    padded_out = [pad_to(d) if i < n - 1 else d for i, d in enumerate(out_w)]
    padded_in = [in_w[0]] + padded_out[:-1]
    pws, pbs = [], []
    for i in range(n):
        w = jnp.transpose(ws[i]).astype(dtype)                                 # (in, out)
        w = jnp.pad(w, ((0, padded_in[i] - in_w[i]), (0, padded_out[i] - out_w[i])))
        b = jnp.pad(bs[i].astype(dtype), (0, padded_out[i] - out_w[i]))
        pws.append(w)
        pbs.append(b.reshape(1, padded_out[i]))
    return tuple(pws), tuple(pbs)


def _mlp_kernel(*refs, n_layers, n_act, act):
    # refs = (x, w0, b0, w1, b1, ..., w_{L-1}, b_{L-1}, out)
    x_ref, o_ref = refs[0], refs[-1]
    h = x_ref[...]
    for i in range(n_layers):
        w = refs[1 + 2 * i][...]
        b = refs[2 + 2 * i][...]
        h = jnp.dot(h, w, preferred_element_type=jnp.float32) + b   # MXU matmul + (1,N) bias
        if i < n_act:                       # dense_layer activation; last_linear has none
            h = act(h)
        # Dropout(p) in eval mode (and at the module default p = 0.0) is the identity.
    o_ref[...] = h.astype(o_ref.dtype)


def mlp_forward(x, ws, bs, *, last_linear=True, activation="ReLU", block_rows=256):
    """Fused eval-mode MLP forward: one pallas_call for the whole layer stack.

    x: (B, D_in); ws[i]: (K_i, N_i) already in (in, out) layout; bs[i]: (1, N_i)
    (see prepare_mlp_params).  Arbitrary B: rows are tiled in blocks of `block_rows`
    on a "parallel" grid axis (sharded across TensorCores on v7x); small B = one step.
    """
    B, d_in = x.shape
    n_layers = len(ws)
    n_act = n_layers - 1 if last_linear else n_layers
    d_out = ws[-1].shape[1]
    act = _ACTIVATIONS[activation]

    bm = min(B, block_rows)
    grid = (pl.cdiv(B, bm),)

    in_specs = [pl.BlockSpec((bm, d_in), lambda i: (i, 0))]
    for w, b in zip(ws, bs):
        in_specs.append(pl.BlockSpec(w.shape, lambda i: (0, 0)))   # weights resident in VMEM
        in_specs.append(pl.BlockSpec(b.shape, lambda i: (0, 0)))
    out_specs = pl.BlockSpec((bm, d_out), lambda i: (i, 0))

    flops = 2 * B * sum(w.shape[0] * w.shape[1] for w in ws)
    bytes_accessed = 4 * (x.size + sum(w.size for w in ws) + sum(b.size for b in bs)
                          + B * d_out)

    kernel = functools.partial(_mlp_kernel, n_layers=n_layers, n_act=n_act, act=act)
    operands = [x]
    for w, b in zip(ws, bs):
        operands += [w, b]

    return pl.pallas_call(
        kernel,
        out_shape=jax.ShapeDtypeStruct((B, d_out), x.dtype),
        grid=grid,
        in_specs=in_specs,
        out_specs=out_specs,
        compiler_params=pltpu.CompilerParams(dimension_semantics=("parallel",)),
        cost_estimate=pl.CostEstimate(flops=flops, transcendentals=0,
                                      bytes_accessed=bytes_accessed),
    )(*operands)


def _reference(x, ws, bs, *, last_linear=True, activation="ReLU"):
    """Pure-JAX reference of MLP.forward (eval mode), using the raw PyTorch-layout params."""
    act = _ACTIVATIONS[activation]
    h = x
    n = len(ws)
    for i, (w, b) in enumerate(zip(ws, bs)):
        h = h @ w.T + b
        if i < n - 1 or not last_linear:
            h = act(h)
    return h


if __name__ == "__main__":
    # MLP(input_dim=32, dims=[64, None], output_dim=16, dropout=0.0, activation='ReLU'):
    #   dense_layer_0: Linear(32, 64) + ReLU
    #   dense_layer_1: Linear(64, 32) + ReLU      (None -> 64 // 2 = 32, per MLP._get_dim)
    #   last_linear  : Linear(32, 16)
    B, D_IN, DIMS, D_OUT = 8, 32, [64, None], 16
    layer_sizes = resolve_layer_sizes(D_IN, DIMS, D_OUT)

    key = jax.random.PRNGKey(0)
    key, kx = jax.random.split(key)
    x = jax.random.normal(kx, (B, D_IN), dtype=jnp.float32)
    ws_raw, bs_raw = init_mlp_params(key, layer_sizes)

    # One-time prep (transpose / 128-lane zero-pad / bias reshape) — hoisted out of the hot path.
    ws, bs = prepare_mlp_params(ws_raw, bs_raw)
    ws, bs = jax.block_until_ready((ws, bs))

    fwd = jax.jit(functools.partial(mlp_forward, last_linear=True, activation="ReLU"))
    out = jax.block_until_ready(fwd(x, ws, bs))

    ref = _reference(x, ws_raw, bs_raw, last_linear=True, activation="ReLU")
    assert out.shape == (B, D_OUT)
    assert jnp.allclose(out, ref, atol=1e-5, rtol=1e-4), "mismatch vs pure-JAX reference"

    print("KERNEL_OK")
</pallas_src>

<mosaic_0001>
module attributes {stable_mosaic.version = 11 : i64} {
  func.func @_mlp_kernel(%arg0: i32, %arg1: memref<8x32xf32, #tpu.memory_space<vmem>>, %arg2: memref<32x128xf32, #tpu.memory_space<vmem>>, %arg3: memref<1x128xf32, #tpu.memory_space<vmem>>, %arg4: memref<128x128xf32, #tpu.memory_space<vmem>>, %arg5: memref<1x128xf32, #tpu.memory_space<vmem>>, %arg6: memref<128x16xf32, #tpu.memory_space<vmem>>, %arg7: memref<1x16xf32, #tpu.memory_space<vmem>>, %arg8: memref<8x16xf32, #tpu.memory_space<vmem>>) attributes {dimension_semantics = [#tpu.dimension_semantics<parallel>], iteration_bounds = array<i64: 1>, scalar_prefetch = 0 : i64, scratch_operands = 0 : i64, tpu.core_type = #tpu.core_type<tc>, window_params = [{transform_indices = @transform_0, window_bounds = array<i64: 8, 32>}, {pipeline_mode = #tpu.pipeline_mode<synchronous>, transform_indices = @transform_1, window_bounds = array<i64: 32, 128>}, {pipeline_mode = #tpu.pipeline_mode<synchronous>, transform_indices = @transform_2, window_bounds = array<i64: 1, 128>}, {pipeline_mode = #tpu.pipeline_mode<synchronous>, transform_indices = @transform_3, window_bounds = array<i64: 128, 128>}, {pipeline_mode = #tpu.pipeline_mode<synchronous>, transform_indices = @transform_4, window_bounds = array<i64: 1, 128>}, {pipeline_mode = #tpu.pipeline_mode<synchronous>, transform_indices = @transform_5, window_bounds = array<i64: 128, 16>}, {pipeline_mode = #tpu.pipeline_mode<synchronous>, transform_indices = @transform_6, window_bounds = array<i64: 1, 16>}, {transform_indices = @transform_7, window_bounds = array<i64: 8, 16>}]} {
    %c0 = arith.constant 0 : index
    %c0_0 = arith.constant 0 : index
    %0 = vector.load %arg1[%c0, %c0_0] : memref<8x32xf32, #tpu.memory_space<vmem>>, vector<8x32xf32>
    %c0_1 = arith.constant 0 : index
    %c0_2 = arith.constant 0 : index
    %1 = vector.load %arg2[%c0_1, %c0_2] : memref<32x128xf32, #tpu.memory_space<vmem>>, vector<32x128xf32>
    %c0_3 = arith.constant 0 : index
    %c0_4 = arith.constant 0 : index
    %2 = vector.load %arg3[%c0_3, %c0_4] : memref<1x128xf32, #tpu.memory_space<vmem>>, vector<1x128xf32>
    %cst = arith.constant dense<0.000000e+00> : vector<8x128xf32>
    %3 = tpu.matmul %0, %1, %cst {dimension_numbers = #tpu.dot_dimension_numbers<[1], [0], [0], [1], [0, 0, 1, 1], [], []>} : vector<8x32xf32>, vector<32x128xf32>, vector<8x128xf32> -> vector<8x128xf32>
    %4 = vector.broadcast %2 : vector<1x128xf32> to vector<8x128xf32>
    %5 = arith.addf %3, %4 : vector<8x128xf32>
    %cst_5 = arith.constant 0.000000e+00 : f32
    %6 = vector.broadcast %cst_5 : f32 to vector<8x128xf32>
    %7 = arith.maximumf %5, %6 : vector<8x128xf32>
    %c0_6 = arith.constant 0 : index
    %c0_7 = arith.constant 0 : index
    %8 = vector.load %arg4[%c0_6, %c0_7] : memref<128x128xf32, #tpu.memory_space<vmem>>, vector<128x128xf32>
    %c0_8 = arith.constant 0 : index
    %c0_9 = arith.constant 0 : index
    %9 = vector.load %arg5[%c0_8, %c0_9] : memref<1x128xf32, #tpu.memory_space<vmem>>, vector<1x128xf32>
    %cst_10 = arith.constant dense<0.000000e+00> : vector<8x128xf32>
    %10 = tpu.matmul %7, %8, %cst_10 {dimension_numbers = #tpu.dot_dimension_numbers<[1], [0], [0], [1], [0, 0, 1, 1], [], []>} : vector<8x128xf32>, vector<128x128xf32>, vector<8x128xf32> -> vector<8x128xf32>
    %11 = vector.broadcast %9 : vector<1x128xf32> to vector<8x128xf32>
    %12 = arith.addf %10, %11 : vector<8x128xf32>
    %cst_11 = arith.constant 0.000000e+00 : f32
    %13 = vector.broadcast %cst_11 : f32 to vector<8x128xf32>
    %14 = arith.maximumf %12, %13 : vector<8x128xf32>
    %c0_12 = arith.constant 0 : index
    %c0_13 = arith.constant 0 : index
    %15 = vector.load %arg6[%c0_12, %c0_13] : memref<128x16xf32, #tpu.memory_space<vmem>>, vector<128x16xf32>
    %c0_14 = arith.constant 0 : index
    %c0_15 = arith.constant 0 : index
    %16 = vector.load %arg7[%c0_14, %c0_15] : memref<1x16xf32, #tpu.memory_space<vmem>>, vector<1x16xf32>
    %cst_16 = arith.constant dense<0.000000e+00> : vector<8x16xf32>
    %17 = tpu.matmul %14, %15, %cst_16 {dimension_numbers = #tpu.dot_dimension_numbers<[1], [0], [0], [1], [0, 0, 1, 1], [], []>} : vector<8x128xf32>, vector<128x16xf32>, vector<8x16xf32> -> vector<8x16xf32>
    %18 = vector.broadcast %16 : vector<1x16xf32> to vector<8x16xf32>
    %19 = arith.addf %17, %18 : vector<8x16xf32>
    %c0_17 = arith.constant 0 : index
    %c0_18 = arith.constant 0 : index
    %20 = vector.load %arg8[%c0_17, %c0_18] : memref<8x16xf32, #tpu.memory_space<vmem>>, vector<8x16xf32>
    tpu.vector_store %arg8[%c0_17, %c0_18], %19 {strides = array<i32>} : memref<8x16xf32, #tpu.memory_space<vmem>>, vector<8x16xf32>,
    return
  }
  func.func @transform_0(%arg0: i32) -> (i32, i32) {
    %c0_i32 = arith.constant 0 : i32
    %c0_i32_0 = arith.constant 0 : i32
    return %arg0, %c0_i32 : i32, i32
  }
  func.func @transform_1(%arg0: i32) -> (i32, i32) {
    %c0_i32 = arith.constant 0 : i32
    %c0_i32_0 = arith.constant 0 : i32
    %c0_i32_1 = arith.constant 0 : i32
    return %c0_i32, %c0_i32_0 : i32, i32
  }
  func.func @transform_2(%arg0: i32) -> (i32, i32) {
    %c0_i32 = arith.constant 0 : i32
    %c0_i32_0 = arith.constant 0 : i32
    %c0_i32_1 = arith.constant 0 : i32
    return %c0_i32, %c0_i32_0 : i32, i32
  }
  func.func @transform_3(%arg0: i32) -> (i32, i32) {
    %c0_i32 = arith.constant 0 : i32
    %c0_i32_0 = arith.constant 0 : i32
    %c0_i32_1 = arith.constant 0 : i32
    return %c0_i32, %c0_i32_0 : i32, i32
  }
  func.func @transform_4(%arg0: i32) -> (i32, i32) {
    %c0_i32 = arith.constant 0 : i32
    %c0_i32_0 = arith.constant 0 : i32
    %c0_i32_1 = arith.constant 0 : i32
    return %c0_i32, %c0_i32_0 : i32, i32
  }
  func.func @transform_5(%arg0: i32) -> (i32, i32) {
    %c0_i32 = arith.constant 0 : i32
    %c0_i32_0 = arith.constant 0 : i32
    %c0_i32_1 = arith.constant 0 : i32
    return %c0_i32, %c0_i32_0 : i32, i32
  }
  func.func @transform_6(%arg0: i32) -> (i32, i32) {
    %c0_i32 = arith.constant 0 : i32
    %c0_i32_0 = arith.constant 0 : i32
    %c0_i32_1 = arith.constant 0 : i32
    return %c0_i32, %c0_i32_0 : i32, i32
  }
  func.func @transform_7(%arg0: i32) -> (i32, i32) {
    %c0_i32 = arith.constant 0 : i32
    %c0_i32_0 = arith.constant 0 : i32
    return %arg0, %c0_i32 : i32, i32
  }
}

</mosaic_0001>

<llo_original>
// kernel: mlp_forward.1
$region0: #{mlp_forward.1}
  #allocation0 [shape = 'u32[]', space=smem, size = 0x4, offset = 0x4, fixed_abs, tag = 'smem constant byte address 0x4 - core index']
  #allocation1 [shape = 'u32[72,128]{1,0:T(1,128)}', space=vmem, size = 0x9000, scoped, tag = 'internal scratch']
  %s0 = inlined_call_operand.vmem [shape: f32[8,32], index: 0, kind: input, shape index: {}]
  %s1 = inlined_call_operand.hbm [shape: f32[32,128], index: 1, kind: input, shape index: {}]
  %s2 = inlined_call_operand.vmem [shape: f32[1,128], index: 2, kind: input, shape index: {}]
  %s3 = inlined_call_operand.vmem [shape: f32[128,128], index: 3, kind: input, shape index: {}]
  %s4 = inlined_call_operand.vmem [shape: f32[1,128], index: 4, kind: input, shape index: {}]
  %s5 = inlined_call_operand.vmem [shape: f32[128,16], index: 5, kind: input, shape index: {}]
  %s6 = inlined_call_operand.vmem [shape: f32[1,16], index: 6, kind: input, shape index: {}]
  %s7 = inlined_call_operand.hbm [shape: f32[8,16], index: 7, kind: output, shape index: {}]
  %s8 = sld [smem:[#allocation0]]
  $region42: #{mlp_forward.1} parent=0
    _
  %s10 = ssub.s32 1, %s8
  %s11 = scalar_select 0, %s10, %s8
  $region1: #{mlp_forward.1} parent=0
    #allocation2 [shape = 'u8[16384]{0}', space=vmem, size = 0x4000, scoped, tag = 'input window, operand 1, single buffered']
    #allocation3 [shape = 's32[1]{0}', space=sflag, size = 0x4, scoped, tag = 'scoped memory for mlp_forward.1']
    #allocation4 [shape = 's32[1]{0}', space=sflag, size = 0x4, scoped, tag = 'scoped memory for mlp_forward.1']
    #allocation5 [shape = 'u8[4096]{0}', space=vmem, size = 0x1000, scoped, tag = 'output window, operand 0, single buffered']
    %12 = vsyncpa [#allocation3], 0
    %13 = vsyncpa [#allocation4], 0
    // Predicated region
    $region2: #{mlp_forward.1} parent=1 // pred_check
      _
    $region3: #{mlp_forward.1} parent=1 // pred_check_branch
      %15 = sbr.rel (0) target = $region5
    $region4: #{mlp_forward.1} parent=1 // pred_region
      _
    $region5: #{mlp_forward.1} parent=1 // pred_fallthru
      _
    // Predicated region
    $region6: #{mlp_forward.1} parent=1 // pred_check
      _
    $region7: #{mlp_forward.1} parent=1 // pred_check_branch
      %17 = sbr.rel (0) target = $region9
    $region8: #{mlp_forward.1} parent=1 // pred_region
      %19 = vsyncadd [#allocation3], 0
      %s20 = sshll.u32 %s1, 4
      %s21 = int_to_ptr.hbm [resolvable:$true] %s20
      %s22 = sshll.u32 [#allocation2], 4
      %s23 = int_to_ptr.vmem [resolvable:$true] %s22
      %28 = dma.hbm_to_vmem [thread:$0]  %s21, 512, %s23, [#allocation3], 128, 128, 8
    $region9: #{mlp_forward.1} parent=1 // pred_fallthru
      _
    // Predicated region
    $region10: #{mlp_forward.1} parent=1 // pred_check
      _
    $region11: #{mlp_forward.1} parent=1 // pred_check_branch
      %30 = sbr.rel (0) target = $region13
    $region12: #{mlp_forward.1} parent=1 // pred_region
      _
    $region13: #{mlp_forward.1} parent=1 // pred_fallthru
      _
    // Predicated region
    $region14: #{mlp_forward.1} parent=1 // pred_check
      _
    $region15: #{mlp_forward.1} parent=1 // pred_check_branch
      %32 = sbr.rel (0) target = $region17
    $region16: #{mlp_forward.1} parent=1 // pred_region
      _
    $region17: #{mlp_forward.1} parent=1 // pred_fallthru
      _
    // Predicated region
    $region18: #{mlp_forward.1} parent=1 // pred_check
      _
    $region19: #{mlp_forward.1} parent=1 // pred_check_branch
      %34 = sbr.rel (0) target = $region21
    $region20: #{mlp_forward.1} parent=1 // pred_region
      _
    $region21: #{mlp_forward.1} parent=1 // pred_fallthru
      _
    // Predicated region
    $region22: #{mlp_forward.1} parent=1 // pred_check
      _
    $region23: #{mlp_forward.1} parent=1 // pred_check_branch
      %36 = sbr.rel (0) target = $region25
    $region24: #{mlp_forward.1} parent=1 // pred_region
      _
    $region25: #{mlp_forward.1} parent=1 // pred_fallthru
      _
    // Predicated region
    $region26: #{mlp_forward.1} parent=1 // pred_check
      _
    $region27: #{mlp_forward.1} parent=1 // pred_check_branch
      %38 = sbr.rel (0) target = $region29
    $region28: #{mlp_forward.1} parent=1 // pred_region
      _
    $region29: #{mlp_forward.1} parent=1 // pred_fallthru
      _
    // Predicated region
    $region30: #{mlp_forward.1} parent=1 // pred_check
      _
    $region31: #{mlp_forward.1} parent=1 // pred_check_branch
      %40 = sbr.rel (0) target = $region33
    $region32: #{mlp_forward.1} parent=1 // pred_region
      %42 = dma.done [#allocation3], 512
    $region33: #{mlp_forward.1} parent=1 // pred_fallthru
      _
    %v43 = vld [vmem:[%s0] sm:$0xff]
    %v44 = vld [vmem:[#allocation2] sm:$0xff]
    %v45 = vld [vmem:[#allocation2 + $0x8] sm:$0xff]
    %v46 = vld [vmem:[#allocation2 + $0x10] sm:$0xff]
    %v47 = vld [vmem:[#allocation2 + $0x18] sm:$0xff]
    %v48 = vld [vmem:[%s2] sm:$0x1]
    %v50 = vperm.slane %v48, 0
    %vm52 = vcmask 261120
    %v54 = vsel %vm52, %v43, 0
    %56 = vmatpush.msra.mxu0 0.0
    %57 = vmatpush.msra.mxu0 0.0
    %58 = vmatpush.msra.mxu0 0.0
    %59 = vmatpush.msra.mxu0 0.0
    %60 = vmatpush.msra.mxu0 0.0
    %61 = vmatpush.msra.mxu0 0.0
    %62 = vmatpush.msra.mxu0 0.0
    %63 = vmatpush.msra.mxu0 0.0
    %64 = vmatpush.msra.mxu0 0.0
    %65 = vmatpush.msra.mxu0 0.0
    %66 = vmatpush.msra.mxu0 0.0
    %67 = vmatpush.msra.mxu0 0.0
    %68 = vmatpush.msra.mxu0 %v47
    %69 = vmatpush.msra.mxu0 %v46
    %70 = vmatpush.msra.mxu0 %v45
    %71 = vmatpush.msra.mxu0 %v44
    %72 = vmatmul.f32.gmra.mxu0 %v54
    %v73 = vpop.f32.mrf.mxu0
    %v74 = vadd.f32 %v50, %v73
    %75 = vdwg.mxu0
    %v76 = vmax.f32 %v74, 0.0
    %v77 = vld [vmem:[%s3] sm:$0xff]
    %v78 = vld [vmem:[%s3 + $0x8] sm:$0xff]
    %v79 = vld [vmem:[%s3 + $0x10] sm:$0xff]
    %v80 = vld [vmem:[%s3 + $0x18] sm:$0xff]
    %v81 = vld [vmem:[%s3 + $0x20] sm:$0xff]
    %v82 = vld [vmem:[%s3 + $0x28] sm:$0xff]
    %v83 = vld [vmem:[%s3 + $0x30] sm:$0xff]
    %v84 = vld [vmem:[%s3 + $0x38] sm:$0xff]
    %v85 = vld [vmem:[%s3 + $0x40] sm:$0xff]
    %v86 = vld [vmem:[%s3 + $0x48] sm:$0xff]
    %v87 = vld [vmem:[%s3 + $0x50] sm:$0xff]
    %v88 = vld [vmem:[%s3 + $0x58] sm:$0xff]
    %v89 = vld [vmem:[%s3 + $0x60] sm:$0xff]
    %v90 = vld [vmem:[%s3 + $0x68] sm:$0xff]
    %v91 = vld [vmem:[%s3 + $0x70] sm:$0xff]
    %v92 = vld [vmem:[%s3 + $0x78] sm:$0xff]
    %v93 = vld [vmem:[%s4] sm:$0x1]
    %v95 = vperm.slane %v93, 0
    %97 = vmatpush.msra.mxu0 %v92
    %98 = vmatpush.msra.mxu0 %v91
    %99 = vmatpush.msra.mxu0 %v90
    %100 = vmatpush.msra.mxu0 %v89
    %101 = vmatpush.msra.mxu0 %v88
    %102 = vmatpush.msra.mxu0 %v87
    %103 = vmatpush.msra.mxu0 %v86
    %104 = vmatpush.msra.mxu0 %v85
    %105 = vmatpush.msra.mxu0 %v84
    %106 = vmatpush.msra.mxu0 %v83
    %107 = vmatpush.msra.mxu0 %v82
    %108 = vmatpush.msra.mxu0 %v81
    %109 = vmatpush.msra.mxu0 %v80
    %110 = vmatpush.msra.mxu0 %v79
    %111 = vmatpush.msra.mxu0 %v78
    %112 = vmatpush.msra.mxu0 %v77
    %113 = vmatmul.f32.gmra.mxu0 %v76
    %v114 = vpop.f32.mrf.mxu0
    %v115 = vadd.f32 %v95, %v114
    %116 = vdwg.mxu0
    %v117 = vmax.f32 %v115, 0.0
    %v118 = vld [vmem:[%s5] sm:$0xff]
    %v119 = vld [vmem:[%s5 + $0x8] sm:$0xff]
    %v120 = vld [vmem:[%s5 + $0x10] sm:$0xff]
    %v121 = vld [vmem:[%s5 + $0x18] sm:$0xff]
    %v122 = vld [vmem:[%s5 + $0x20] sm:$0xff]
    %v123 = vld [vmem:[%s5 + $0x28] sm:$0xff]
    %v124 = vld [vmem:[%s5 + $0x30] sm:$0xff]
    %v125 = vld [vmem:[%s5 + $0x38] sm:$0xff]
    %v126 = vld [vmem:[%s5 + $0x40] sm:$0xff]
    %v127 = vld [vmem:[%s5 + $0x48] sm:$0xff]
    %v128 = vld [vmem:[%s5 + $0x50] sm:$0xff]
    %v129 = vld [vmem:[%s5 + $0x58] sm:$0xff]
    %v130 = vld [vmem:[%s5 + $0x60] sm:$0xff]
    %v131 = vld [vmem:[%s5 + $0x68] sm:$0xff]
    %v132 = vld [vmem:[%s5 + $0x70] sm:$0xff]
    %v133 = vld [vmem:[%s5 + $0x78] sm:$0xff]
    %v134 = vld [vmem:[%s6] sm:$0x1]
    %v136 = vperm.slane %v134, 0
    %138 = vmatpush.msra.mxu0 %v133
    %139 = vmatpush.msra.mxu0 %v132
    %140 = vmatpush.msra.mxu0 %v131
    %141 = vmatpush.msra.mxu0 %v130
    %142 = vmatpush.msra.mxu0 %v129
    %143 = vmatpush.msra.mxu0 %v128
    %144 = vmatpush.msra.mxu0 %v127
    %145 = vmatpush.msra.mxu0 %v126
    %146 = vmatpush.msra.mxu0 %v125
    %147 = vmatpush.msra.mxu0 %v124
    %148 = vmatpush.msra.mxu0 %v123
    %149 = vmatpush.msra.mxu0 %v122
    %150 = vmatpush.msra.mxu0 %v121
    %151 = vmatpush.msra.mxu0 %v120
    %152 = vmatpush.msra.mxu0 %v119
    %153 = vmatpush.msra.mxu0 %v118
    %154 = vmatmul.f32.gmra.mxu0 %v117
    %v155 = vpop.f32.mrf.mxu0
    %v156 = vadd.f32 %v136, %v155
    %157 = vdwg.mxu0
    %vm158 = vcmask 130048
    %159 = vst.msk [vmem:[#allocation5] sm:$0xff] %vm158, %v156
    // Predicated region
    $region34: #{mlp_forward.1} parent=1 // pred_check
      _
    $region35: #{mlp_forward.1} parent=1 // pred_check_branch
      %161 = sbr.rel (0) target = $region37
    $region36: #{mlp_forward.1} parent=1 // pred_region
      %163 = vsyncadd [#allocation4], 0
      %s165 = sshll.u32 [#allocation5], 4
      %s166 = int_to_ptr.vmem [resolvable:$true] %s165
      %s167 = sshll.u32 %s7, 4
      %s168 = int_to_ptr.hbm [resolvable:$true] %s167
      %170 = dma.vmem_to_hbm [thread:$0]  %s166, 128, %s168, [#allocation4]
    $region37: #{mlp_forward.1} parent=1 // pred_fallthru
      _
    // Predicated region
    $region38: #{mlp_forward.1} parent=1 // pred_check
      _
    $region39: #{mlp_forward.1} parent=1 // pred_check_branch
      %172 = sbr.rel (0) target = $region41
    $region40: #{mlp_forward.1} parent=1 // pred_region
      %174 = dma.done [#allocation4], 128
    $region41: #{mlp_forward.1} parent=1 // pred_fallthru
      _
    %175 = vsyncpa [#allocation3], 1
    %176 = vsyncpa [#allocation4], 1

</llo_original>
